<compile_context>
chip_gen: v5e
topology: v5e:2x2
jax: 0.10.0
libtpu: 0.0.40
codegen_flags: <defaults>
</compile_context>

<pallas_src>
import jax
import jax.numpy as jnp
from jax.experimental import pallas as pl
from jax.experimental.pallas import tpu as pltpu

MAX_SEQ_LEN = 10


def cross_attention_kernel(
    # inputs
    text_ref, image_ref,     # (B, D), (B, D)
    wvi_ref, bvi_ref,        # value_image:  (D, H), (1, H)
    wvt_ref, bvt_ref,        # value_text:   (D, H), (1, H)
    wout_ref, bout_ref,      # output_fc:    (2H, D), (1, D)
    # output
    out_ref,                 # (B, D)
):
    H = wvi_ref.shape[1]

    text = text_ref[...]      # (B, D)
    image = image_ref[...]    # (B, D)

    # Collapsed cross-attention: attended_image.mean(1) == value_image(image_row),
    # attended_text.mean(1)  == value_text(text_row).  Plain 2-D MXU matmuls.
    mean_img = (jnp.dot(image, wvi_ref[...],
                        preferred_element_type=jnp.float32) + bvi_ref[...])
    mean_txt = (jnp.dot(text, wvt_ref[...],
                        preferred_element_type=jnp.float32) + bvt_ref[...])

    # fused = concat([mean_img, mean_txt], -1); out = fused @ Wout + bout,
    # expressed as a split matmul (static sublane slices of Wout) to avoid a
    # cross-lane concat inside the kernel.
    out = (jnp.dot(mean_img, wout_ref[:H, :],
                   preferred_element_type=jnp.float32)
           + jnp.dot(mean_txt, wout_ref[H:, :],
                     preferred_element_type=jnp.float32)
           + bout_ref[...])
    out_ref[...] = out.astype(out_ref.dtype)


def cross_attention_fusion(text, image, params, max_seq_len=MAX_SEQ_LEN):
    """Pallas forward.  `max_seq_len` is accepted for API parity; the output is
    provably independent of it (softmax over identical rows is uniform)."""
    B, D = text.shape
    del max_seq_len

    def b2(b):  # biases as (1, out) rows so they broadcast cleanly in VMEM
        return b.reshape(1, -1)

    args = [
        text, image,
        params["wvi"], b2(params["bvi"]),
        params["wvt"], b2(params["bvt"]),
        params["wout"], b2(params["bout"]),
    ]
    vmem_spec = pl.BlockSpec(memory_space=pltpu.MemorySpace.VMEM)
    # Footprint at B=2, D=H=32: < 16 KiB — full-extent VMEM blocks, no grid.
    # At this size the call is dominated by fixed per-call overhead; for real
    # workloads simply batch many samples into one call (the kernel already
    # handles arbitrary B and grows only the two (B, D) operands).
    return pl.pallas_call(
        cross_attention_kernel,
        out_shape=jax.ShapeDtypeStruct((B, D), jnp.float32),
        in_specs=[vmem_spec] * len(args),
        out_specs=vmem_spec,
    )(*args)


def init_params(key, input_dim, hidden_dim):
    """Deterministic init mirroring nn.Linear shapes (weights stored as (in, out))."""
    names_io = [
        ("wqt", "bqt", input_dim, hidden_dim),
        ("wki", "bki", input_dim, hidden_dim),
        ("wvi", "bvi", input_dim, hidden_dim),
        ("wqi", "bqi", input_dim, hidden_dim),
        ("wkt", "bkt", input_dim, hidden_dim),
        ("wvt", "bvt", input_dim, hidden_dim),
        ("wout", "bout", 2 * hidden_dim, input_dim),
    ]
    params = {}
    keys = jax.random.split(key, 2 * len(names_io))
    for i, (wn, bn, fin, fout) in enumerate(names_io):
        bound = 1.0 / (fin ** 0.5)
        params[wn] = jax.random.uniform(keys[2 * i], (fin, fout),
                                        jnp.float32, -bound, bound)
        params[bn] = jax.random.uniform(keys[2 * i + 1], (fout,),
                                        jnp.float32, -bound, bound)
    return params


def reference_forward(text, image, params, max_seq_len=MAX_SEQ_LEN):
    """Pure-JAX mirror of the FULL PyTorch forward (expand -> QKV -> softmax ->
    AV -> mean -> concat -> fc).  Used to validate the collapsed kernel."""
    B, D = text.shape
    text_e = jnp.broadcast_to(text[:, None, :], (B, max_seq_len, D))
    image_e = jnp.broadcast_to(image[:, None, :], (B, max_seq_len, D))

    def lin(x, w, b):
        return x @ w + b

    qt = lin(text_e, params["wqt"], params["bqt"])
    ki = lin(image_e, params["wki"], params["bki"])
    vi = lin(image_e, params["wvi"], params["bvi"])
    a_ti = jax.nn.softmax(qt @ jnp.swapaxes(ki, -2, -1), axis=-1)
    attended_image = a_ti @ vi

    qi = lin(image_e, params["wqi"], params["bqi"])
    kt = lin(text_e, params["wkt"], params["bkt"])
    vt = lin(text_e, params["wvt"], params["bvt"])
    a_it = jax.nn.softmax(qi @ jnp.swapaxes(kt, -2, -1), axis=-1)
    attended_text = a_it @ vt

    fused = jnp.concatenate(
        [attended_image.mean(axis=1), attended_text.mean(axis=1)], axis=-1)
    return fused @ params["wout"] + params["bout"]


if __name__ == "__main__":
    B, INPUT_DIM, HIDDEN_DIM = 2, 32, 32

    key = jax.random.PRNGKey(0)
    k_text, k_image, k_params = jax.random.split(key, 3)
    text_features = jax.random.normal(k_text, (B, INPUT_DIM), jnp.float32)
    image_features = jax.random.normal(k_image, (B, INPUT_DIM), jnp.float32)
    params = init_params(k_params, INPUT_DIM, HIDDEN_DIM)

    out = cross_attention_fusion(text_features, image_features, params)
    out = jax.block_until_ready(out)

    ref = reference_forward(text_features, image_features, params)
    assert out.shape == (B, INPUT_DIM)
    assert jnp.allclose(out, ref, rtol=1e-4, atol=1e-4), "mismatch vs JAX reference"

    print("KERNEL_OK")
</pallas_src>

<mosaic_0001>
module attributes {stable_mosaic.version = 11 : i64} {
  func.func @cross_attention_kernel(%arg0: memref<2x32xf32, #tpu.memory_space<vmem>>, %arg1: memref<2x32xf32, #tpu.memory_space<vmem>>, %arg2: memref<32x32xf32, #tpu.memory_space<vmem>>, %arg3: memref<1x32xf32, #tpu.memory_space<vmem>>, %arg4: memref<32x32xf32, #tpu.memory_space<vmem>>, %arg5: memref<1x32xf32, #tpu.memory_space<vmem>>, %arg6: memref<64x32xf32, #tpu.memory_space<vmem>>, %arg7: memref<1x32xf32, #tpu.memory_space<vmem>>, %arg8: memref<2x32xf32, #tpu.memory_space<vmem>>) attributes {dimension_semantics = [], scalar_prefetch = 0 : i64, scratch_operands = 0 : i64, tpu.core_type = #tpu.core_type<tc>} {
    %c0 = arith.constant 0 : index
    %c0_0 = arith.constant 0 : index
    %0 = vector.load %arg0[%c0, %c0_0] : memref<2x32xf32, #tpu.memory_space<vmem>>, vector<2x32xf32>
    %c0_1 = arith.constant 0 : index
    %c0_2 = arith.constant 0 : index
    %1 = vector.load %arg1[%c0_1, %c0_2] : memref<2x32xf32, #tpu.memory_space<vmem>>, vector<2x32xf32>
    %c0_3 = arith.constant 0 : index
    %c0_4 = arith.constant 0 : index
    %2 = vector.load %arg2[%c0_3, %c0_4] : memref<32x32xf32, #tpu.memory_space<vmem>>, vector<32x32xf32>
    %cst = arith.constant dense<0.000000e+00> : vector<2x32xf32>
    %3 = tpu.matmul %1, %2, %cst {dimension_numbers = #tpu.dot_dimension_numbers<[1], [0], [0], [1], [0, 0, 1, 1], [], []>} : vector<2x32xf32>, vector<32x32xf32>, vector<2x32xf32> -> vector<2x32xf32>
    %c0_5 = arith.constant 0 : index
    %c0_6 = arith.constant 0 : index
    %4 = vector.load %arg3[%c0_5, %c0_6] : memref<1x32xf32, #tpu.memory_space<vmem>>, vector<1x32xf32>
    %5 = vector.broadcast %4 : vector<1x32xf32> to vector<2x32xf32>
    %6 = arith.addf %3, %5 : vector<2x32xf32>
    %c0_7 = arith.constant 0 : index
    %c0_8 = arith.constant 0 : index
    %7 = vector.load %arg4[%c0_7, %c0_8] : memref<32x32xf32, #tpu.memory_space<vmem>>, vector<32x32xf32>
    %cst_9 = arith.constant dense<0.000000e+00> : vector<2x32xf32>
    %8 = tpu.matmul %0, %7, %cst_9 {dimension_numbers = #tpu.dot_dimension_numbers<[1], [0], [0], [1], [0, 0, 1, 1], [], []>} : vector<2x32xf32>, vector<32x32xf32>, vector<2x32xf32> -> vector<2x32xf32>
    %c0_10 = arith.constant 0 : index
    %c0_11 = arith.constant 0 : index
    %9 = vector.load %arg5[%c0_10, %c0_11] : memref<1x32xf32, #tpu.memory_space<vmem>>, vector<1x32xf32>
    %10 = vector.broadcast %9 : vector<1x32xf32> to vector<2x32xf32>
    %11 = arith.addf %8, %10 : vector<2x32xf32>
    %c0_12 = arith.constant 0 : index
    %c0_13 = arith.constant 0 : index
    %12 = vector.load %arg6[%c0_12, %c0_13] : memref<64x32xf32, #tpu.memory_space<vmem>>, vector<32x32xf32>
    %cst_14 = arith.constant dense<0.000000e+00> : vector<2x32xf32>
    %13 = tpu.matmul %6, %12, %cst_14 {dimension_numbers = #tpu.dot_dimension_numbers<[1], [0], [0], [1], [0, 0, 1, 1], [], []>} : vector<2x32xf32>, vector<32x32xf32>, vector<2x32xf32> -> vector<2x32xf32>
    %c32 = arith.constant 32 : index
    %c0_15 = arith.constant 0 : index
    %14 = vector.load %arg6[%c32, %c0_15] : memref<64x32xf32, #tpu.memory_space<vmem>>, vector<32x32xf32>
    %cst_16 = arith.constant dense<0.000000e+00> : vector<2x32xf32>
    %15 = tpu.matmul %11, %14, %cst_16 {dimension_numbers = #tpu.dot_dimension_numbers<[1], [0], [0], [1], [0, 0, 1, 1], [], []>} : vector<2x32xf32>, vector<32x32xf32>, vector<2x32xf32> -> vector<2x32xf32>
    %16 = arith.addf %13, %15 : vector<2x32xf32>
    %c0_17 = arith.constant 0 : index
    %c0_18 = arith.constant 0 : index
    %17 = vector.load %arg7[%c0_17, %c0_18] : memref<1x32xf32, #tpu.memory_space<vmem>>, vector<1x32xf32>
    %18 = vector.broadcast %17 : vector<1x32xf32> to vector<2x32xf32>
    %19 = arith.addf %16, %18 : vector<2x32xf32>
    %c0_19 = arith.constant 0 : index
    %c0_20 = arith.constant 0 : index
    %20 = vector.load %arg8[%c0_19, %c0_20] : memref<2x32xf32, #tpu.memory_space<vmem>>, vector<2x32xf32>
    tpu.vector_store %arg8[%c0_19, %c0_20], %19 {strides = array<i32>} : memref<2x32xf32, #tpu.memory_space<vmem>>, vector<2x32xf32>,
    return
  }
}

</mosaic_0001>

<llo_original>
// kernel: tpu_custom_call.1
$region0: #{tpu_custom_call.1}
  #allocation0 [shape = 'u32[]', space=smem, size = 0x4, offset = 0x4, fixed_abs, tag = 'smem constant byte address 0x4 - core index']
  #allocation1 [shape = 'u32[72,128]{1,0:T(1,128)}', space=vmem, size = 0x9000, scoped, tag = 'internal scratch']
  %s0 = inlined_call_operand.vmem [shape: f32[2,32], index: 0, kind: input, shape index: {}]
  %s1 = inlined_call_operand.vmem [shape: f32[2,32], index: 1, kind: input, shape index: {}]
  %s2 = inlined_call_operand.vmem [shape: f32[32,32], index: 2, kind: input, shape index: {}]
  %s3 = inlined_call_operand.vmem [shape: f32[1,32], index: 3, kind: input, shape index: {}]
  %s4 = inlined_call_operand.vmem [shape: f32[32,32], index: 4, kind: input, shape index: {}]
  %s5 = inlined_call_operand.vmem [shape: f32[1,32], index: 5, kind: input, shape index: {}]
  %s6 = inlined_call_operand.vmem [shape: f32[64,32], index: 6, kind: input, shape index: {}]
  %s7 = inlined_call_operand.vmem [shape: f32[1,32], index: 7, kind: input, shape index: {}]
  %s8 = inlined_call_operand.hbm [shape: f32[2,32], index: 8, kind: output, shape index: {}]
  %s9 = sld [smem:[#allocation0]]
  $region42: #{tpu_custom_call.1} parent=0
    _
  %s11 = ssub.s32 1, %s9
  %s12 = scalar_select 0, %s11, %s9
  $region1: #{tpu_custom_call.1} parent=0
    #allocation2 [shape = 'u8[1024]{0}', space=vmem, size = 0x400, scoped, tag = 'output window, operand 0, single buffered']
    #allocation3 [shape = 's32[1]{0}', space=sflag, size = 0x4, scoped, tag = 'scoped memory for tpu_custom_call.1']
    %13 = vsyncpa [#allocation3], 0
    // Predicated region
    $region2: #{tpu_custom_call.1} parent=1 // pred_check
      _
    $region3: #{tpu_custom_call.1} parent=1 // pred_check_branch
      %15 = sbr.rel (0) target = $region5
    $region4: #{tpu_custom_call.1} parent=1 // pred_region
      _
    $region5: #{tpu_custom_call.1} parent=1 // pred_fallthru
      _
    // Predicated region
    $region6: #{tpu_custom_call.1} parent=1 // pred_check
      _
    $region7: #{tpu_custom_call.1} parent=1 // pred_check_branch
      %17 = sbr.rel (0) target = $region9
    $region8: #{tpu_custom_call.1} parent=1 // pred_region
      _
    $region9: #{tpu_custom_call.1} parent=1 // pred_fallthru
      _
    // Predicated region
    $region10: #{tpu_custom_call.1} parent=1 // pred_check
      _
    $region11: #{tpu_custom_call.1} parent=1 // pred_check_branch
      %19 = sbr.rel (0) target = $region13
    $region12: #{tpu_custom_call.1} parent=1 // pred_region
      _
    $region13: #{tpu_custom_call.1} parent=1 // pred_fallthru
      _
    // Predicated region
    $region14: #{tpu_custom_call.1} parent=1 // pred_check
      _
    $region15: #{tpu_custom_call.1} parent=1 // pred_check_branch
      %21 = sbr.rel (0) target = $region17
    $region16: #{tpu_custom_call.1} parent=1 // pred_region
      _
    $region17: #{tpu_custom_call.1} parent=1 // pred_fallthru
      _
    // Predicated region
    $region18: #{tpu_custom_call.1} parent=1 // pred_check
      _
    $region19: #{tpu_custom_call.1} parent=1 // pred_check_branch
      %23 = sbr.rel (0) target = $region21
    $region20: #{tpu_custom_call.1} parent=1 // pred_region
      _
    $region21: #{tpu_custom_call.1} parent=1 // pred_fallthru
      _
    // Predicated region
    $region22: #{tpu_custom_call.1} parent=1 // pred_check
      _
    $region23: #{tpu_custom_call.1} parent=1 // pred_check_branch
      %25 = sbr.rel (0) target = $region25
    $region24: #{tpu_custom_call.1} parent=1 // pred_region
      _
    $region25: #{tpu_custom_call.1} parent=1 // pred_fallthru
      _
    // Predicated region
    $region26: #{tpu_custom_call.1} parent=1 // pred_check
      _
    $region27: #{tpu_custom_call.1} parent=1 // pred_check_branch
      %27 = sbr.rel (0) target = $region29
    $region28: #{tpu_custom_call.1} parent=1 // pred_region
      _
    $region29: #{tpu_custom_call.1} parent=1 // pred_fallthru
      _
    // Predicated region
    $region30: #{tpu_custom_call.1} parent=1 // pred_check
      _
    $region31: #{tpu_custom_call.1} parent=1 // pred_check_branch
      %29 = sbr.rel (0) target = $region33
    $region32: #{tpu_custom_call.1} parent=1 // pred_region
      _
    $region33: #{tpu_custom_call.1} parent=1 // pred_fallthru
      _
    %v30 = vld [vmem:[%s0] sm:$0x3]
    %v31 = vld [vmem:[%s1] sm:$0x3]
    %v32 = vld [vmem:[%s2] sm:$0xff]
    %v33 = vld [vmem:[%s2 + $0x8] sm:$0xff]
    %v34 = vld [vmem:[%s2 + $0x10] sm:$0xff]
    %v35 = vld [vmem:[%s2 + $0x18] sm:$0xff]
    %v36 = vld [vmem:[%s3] sm:$0x1]
    %v38 = vperm.slane %v36, 0
    %vm40 = vcmask 261120
    %v42 = vsel %vm40, %v31, 0
    %44 = vmatpush.msra.mxu0 0.0
    %45 = vmatpush.msra.mxu0 0.0
    %46 = vmatpush.msra.mxu0 0.0
    %47 = vmatpush.msra.mxu0 0.0
    %48 = vmatpush.msra.mxu0 0.0
    %49 = vmatpush.msra.mxu0 0.0
    %50 = vmatpush.msra.mxu0 0.0
    %51 = vmatpush.msra.mxu0 0.0
    %52 = vmatpush.msra.mxu0 0.0
    %53 = vmatpush.msra.mxu0 0.0
    %54 = vmatpush.msra.mxu0 0.0
    %55 = vmatpush.msra.mxu0 0.0
    %56 = vmatpush.msra.mxu0 %v35
    %57 = vmatpush.msra.mxu0 %v34
    %58 = vmatpush.msra.mxu0 %v33
    %59 = vmatpush.msra.mxu0 %v32
    %60 = vmatmul.f32.gmra.mxu0 %v42
    %v61 = vpop.f32.mrf.mxu0
    %v62 = vadd.f32 %v38, %v61
    %63 = vdwg.mxu0
    %v64 = vld [vmem:[%s4] sm:$0xff]
    %v65 = vld [vmem:[%s4 + $0x8] sm:$0xff]
    %v66 = vld [vmem:[%s4 + $0x10] sm:$0xff]
    %v67 = vld [vmem:[%s4 + $0x18] sm:$0xff]
    %v68 = vld [vmem:[%s5] sm:$0x1]
    %v70 = vperm.slane %v68, 0
    %v73 = vsel %vm40, %v30, 0
    %75 = vmatpush.msra.mxu0 0.0
    %76 = vmatpush.msra.mxu0 0.0
    %77 = vmatpush.msra.mxu0 0.0
    %78 = vmatpush.msra.mxu0 0.0
    %79 = vmatpush.msra.mxu0 0.0
    %80 = vmatpush.msra.mxu0 0.0
    %81 = vmatpush.msra.mxu0 0.0
    %82 = vmatpush.msra.mxu0 0.0
    %83 = vmatpush.msra.mxu0 0.0
    %84 = vmatpush.msra.mxu0 0.0
    %85 = vmatpush.msra.mxu0 0.0
    %86 = vmatpush.msra.mxu0 0.0
    %87 = vmatpush.msra.mxu0 %v67
    %88 = vmatpush.msra.mxu0 %v66
    %89 = vmatpush.msra.mxu0 %v65
    %90 = vmatpush.msra.mxu0 %v64
    %91 = vmatmul.f32.gmra.mxu0 %v73
    %v92 = vpop.f32.mrf.mxu0
    %v93 = vadd.f32 %v70, %v92
    %94 = vdwg.mxu0
    %v95 = vld [vmem:[%s6] sm:$0xff]
    %v96 = vld [vmem:[%s6 + $0x8] sm:$0xff]
    %v97 = vld [vmem:[%s6 + $0x10] sm:$0xff]
    %v98 = vld [vmem:[%s6 + $0x18] sm:$0xff]
    %v99 = vld [vmem:[%s6 + $0x20] sm:$0xff]
    %v100 = vld [vmem:[%s6 + $0x28] sm:$0xff]
    %v101 = vld [vmem:[%s6 + $0x30] sm:$0xff]
    %v102 = vld [vmem:[%s6 + $0x38] sm:$0xff]
    %v104 = vsel %vm40, %v93, 0
    %106 = vmatpush.msra.mxu0 0.0
    %107 = vmatpush.msra.mxu0 0.0
    %108 = vmatpush.msra.mxu0 0.0
    %109 = vmatpush.msra.mxu0 0.0
    %110 = vmatpush.msra.mxu0 0.0
    %111 = vmatpush.msra.mxu0 0.0
    %112 = vmatpush.msra.mxu0 0.0
    %113 = vmatpush.msra.mxu0 0.0
    %114 = vmatpush.msra.mxu0 0.0
    %115 = vmatpush.msra.mxu0 0.0
    %116 = vmatpush.msra.mxu0 0.0
    %117 = vmatpush.msra.mxu0 0.0
    %118 = vmatpush.msra.mxu0 %v102
    %119 = vmatpush.msra.mxu0 %v101
    %120 = vmatpush.msra.mxu0 %v100
    %121 = vmatpush.msra.mxu0 %v99
    %122 = vmatmul.f32.gmra.mxu0 %v104
    %v123 = vpop.f32.mrf.mxu0
    %v124 = vadd.f32 0.0, %v123
    %125 = vdwg.mxu0
    %v127 = vsel %vm40, %v62, 0
    %129 = vmatpush.msra.mxu0 0.0
    %130 = vmatpush.msra.mxu0 0.0
    %131 = vmatpush.msra.mxu0 0.0
    %132 = vmatpush.msra.mxu0 0.0
    %133 = vmatpush.msra.mxu0 0.0
    %134 = vmatpush.msra.mxu0 0.0
    %135 = vmatpush.msra.mxu0 0.0
    %136 = vmatpush.msra.mxu0 0.0
    %137 = vmatpush.msra.mxu0 0.0
    %138 = vmatpush.msra.mxu0 0.0
    %139 = vmatpush.msra.mxu0 0.0
    %140 = vmatpush.msra.mxu0 0.0
    %141 = vmatpush.msra.mxu0 %v98
    %142 = vmatpush.msra.mxu0 %v97
    %143 = vmatpush.msra.mxu0 %v96
    %144 = vmatpush.msra.mxu0 %v95
    %145 = vmatmul.f32.gmra.mxu0 %v127
    %v146 = vpop.f32.mrf.mxu0
    %v147 = vadd.f32 %v124, %v146
    %148 = vdwg.mxu0
    %v149 = vld [vmem:[%s7] sm:$0x1]
    %v151 = vperm.slane %v149, 0
    %v153 = vadd.f32 %v147, %v151
    %vm154 = vcmask 254976
    %155 = vst.msk [vmem:[#allocation2] sm:$0x3] %vm154, %v153
    // Predicated region
    $region34: #{tpu_custom_call.1} parent=1 // pred_check
      _
    $region35: #{tpu_custom_call.1} parent=1 // pred_check_branch
      %157 = sbr.rel (0) target = $region37
    $region36: #{tpu_custom_call.1} parent=1 // pred_region
      %159 = vsyncadd [#allocation3], 0
      %s161 = sshll.u32 [#allocation2], 4
      %s162 = int_to_ptr.vmem [resolvable:$true] %s161
      %s163 = sshll.u32 %s8, 4
      %s164 = int_to_ptr.hbm [resolvable:$true] %s163
      %166 = dma.vmem_to_hbm [thread:$0]  %s162, 32, %s164, [#allocation3]
    $region37: #{tpu_custom_call.1} parent=1 // pred_fallthru
      _
    // Predicated region
    $region38: #{tpu_custom_call.1} parent=1 // pred_check
      _
    $region39: #{tpu_custom_call.1} parent=1 // pred_check_branch
      %168 = sbr.rel (0) target = $region41
    $region40: #{tpu_custom_call.1} parent=1 // pred_region
      %170 = dma.done [#allocation3], 32
    $region41: #{tpu_custom_call.1} parent=1 // pred_fallthru
      _
    %171 = vsyncpa [#allocation3], 1

</llo_original>
